<compile_context>
chip_gen: v7x
topology: tpu7x:2x2x1
jax: 0.10.0
libtpu: 0.0.40
codegen_flags: <defaults>
</compile_context>

<pallas_src>
import math

import jax
import jax.numpy as jnp
from jax.experimental import pallas as pl
from jax.experimental.pallas import tpu as pltpu


# ----------------------------------------------------------------------------
# Equivariance bookkeeping: positions of the k x k stencil related by the
# listed symmetries share one parameter index (orbit id).
# TODO(synk): only rot90 / hflip generators are reconstructed here; the
# original repo's get_equivariance_indices(nx, nh, symmetry_list) may support
# more symmetry names and nh > 1.
# ----------------------------------------------------------------------------
def get_equivariance_indices(kernel_size, symmetry_list):
    k = kernel_size
    n = k * k

    def pos(i, j):
        return i * k + j

    gens = []
    if "rot90" in symmetry_list:
        rot = [0] * n
        for i in range(k):
            for j in range(k):
                rot[pos(i, j)] = pos(j, k - 1 - i)
        gens.append(rot)
    if "hflip" in symmetry_list or "flip" in symmetry_list:
        fl = [0] * n
        for i in range(k):
            for j in range(k):
                fl[pos(i, j)] = pos(i, k - 1 - j)
        gens.append(fl)

    idx = [-1] * n
    next_id = 0
    for start in range(n):
        if idx[start] != -1:
            continue
        idx[start] = next_id
        stack = [start]
        while stack:
            q = stack.pop()
            for g in gens:
                r = g[q]
                if idx[r] == -1:
                    idx[r] = next_id
                    stack.append(r)
        next_id += 1
    return idx


def expand_weight(weight, eq_indices, c_in, c_out, kernel_size):
    """Reproduces the torch forward's weight expansion, including the
    (c_in, c_out, k*k) -> .view(c_out, c_in, k, k) raw row-major reinterpret.
    (Matches PyTorch only for a contiguous torch weight, which Parameter is.)"""
    k = kernel_size
    eq = jnp.asarray(eq_indices, dtype=jnp.int32)
    w_g = weight[:, :, eq]                      # (c_in, c_out, k*k)
    return w_g.reshape(c_out, c_in, k, k)       # row-major reinterpret (== torch .view)


# ----------------------------------------------------------------------------
# Fused (pad folded out) im2col-slab + single GEMM + bias Pallas kernel.
# ----------------------------------------------------------------------------
def gconv2d_forward(x_nchw, weight, bias, eq_indices, kernel_size, *,
                    compute_dtype=None, tile_target_lanes=2048,
                    vmem_limit_bytes=32 * 1024 * 1024):
    N, Cin, H, W = x_nchw.shape
    k = kernel_size
    Cout = weight.shape[1]
    assert k % 2 == 1, "padding='same' implemented for odd kernels (stride 1)"
    p = k // 2
    Hp, Wp = H + 2 * p, W + 2 * p
    Lseg = Hp * Wp                      # flat padded length of one image
    KK = k * k
    cd = compute_dtype if compute_dtype is not None else x_nchw.dtype
    out_dtype = x_nchw.dtype
    # TODO(synk): default compute_dtype to bfloat16 on v6e/v7x (via
    # pltpu.get_tpu_info) once callers accept bf16-input rounding; f32 default
    # keeps exact module semantics.

    # ---- parameter expansion (tiny, constant-folded by XLA) ----------------
    w_full = expand_weight(weight, eq_indices, Cin, Cout, k)        # (Cout,Cin,k,k)
    # Single-GEMM weight matrix: column (dy*k + dx)*Cin + ci  <->  slab row.
    w_gemm = jnp.transpose(w_full, (0, 2, 3, 1)).reshape(Cout, KK * Cin).astype(cd)
    b2 = (jnp.zeros((Cout, 1), jnp.float32) if bias is None
          else bias.reshape(Cout, 1).astype(jnp.float32))

    # ---- tiling of the packed flat axis -------------------------------------
    # Output position g = n*Lseg + i*Wp + j (padded coords); tap (dy,dx) reads
    # input at g + dy*Wp + dx.  A tile of Tm outputs therefore needs its own
    # (Cin, Tm) input block plus a lane-aligned halo of the next Th columns.
    halo = (k - 1) * Wp + (k - 1)
    Th = 128 * max(1, pl.cdiv(halo, 128))         # halo block, lane aligned
    G_out = N * Lseg                              # packed output positions
    # Lane-dense tiles: a multiple of Th (keeps the halo index_map "Blocked"),
    # ~tile_target_lanes wide, but at least ~2 grid steps when possible so the
    # DMA pipeline double-buffers and both v7x TensorCores get work.
    q = max(1, min(tile_target_lanes // Th, pl.cdiv(G_out, 2 * Th)))
    Tm = q * Th
    num_tiles = pl.cdiv(G_out, Tm)
    G_round = num_tiles * Tm
    Lx = G_round + Th                             # room for the last tile's halo

    # ---- input packing: one fused pad + cast + pack pass --------------------
    # Single spatial zero-pad per image (XLA fuses the cast, the N<->Cin
    # transpose and the small tail pad into the same copy), batch folded into
    # the flat axis so small images are packed into wide lane-dense GEMMs.
    xp = jnp.pad(x_nchw.astype(cd), ((0, 0), (0, 0), (p, p), (p, p)))   # (N,Cin,Hp,Wp)
    x_flat = jnp.transpose(xp, (1, 0, 2, 3)).reshape(Cin, G_out)
    x_flat = jnp.pad(x_flat, ((0, 0), (0, Lx - G_out)))

    def kernel(xc_ref, xh_ref, w_ref, b_ref, o_ref, comb_ref, slab_ref):
        # xc_ref: (Cin, Tm)  current tile     xh_ref: (Cin, Th)  next-tile halo
        # w_ref : (Cout, KK*Cin)              b_ref : (Cout, 1) f32
        # o_ref : (Cout, Tm)  lane-dense      comb_ref: (Cin, Tm+Th) scratch
        # slab_ref: (KK*Cin, Tm) im2col slab scratch
        #
        # Stitch current tile + halo once (both stores are lane-aligned).
        comb_ref[:, :Tm] = xc_ref[...]
        comb_ref[:, Tm:] = xh_ref[...]
        # Build the stacked im2col slab ONCE: each tap's lane shift is a single
        # static-offset VMEM read (the only realignment cost), stored aligned.
        for t in range(KK):                       # unrolled at trace time
            dy, dx = divmod(t, k)
            off = dy * Wp + dx                    # static lane shift of this tap
            slab_ref[t * Cin:(t + 1) * Cin, :] = comb_ref[:, off:off + Tm]
        # Single K = Cin*k*k MXU GEMM with f32 accumulation + f32 bias.
        acc = jnp.dot(w_ref[...], slab_ref[...],
                      preferred_element_type=jnp.float32)
        o_ref[...] = (acc + b_ref[...]).astype(o_ref.dtype)

    out_flat = pl.pallas_call(
        kernel,
        out_shape=jax.ShapeDtypeStruct((Cout, G_round), out_dtype),
        grid_spec=pltpu.PrefetchScalarGridSpec(
            num_scalar_prefetch=0,
            grid=(num_tiles,),
            in_specs=[
                pl.BlockSpec((Cin, Tm), lambda m: (0, m)),             # current tile
                pl.BlockSpec((Cin, Th), lambda m: (0, (m + 1) * q)),   # halo: next Th cols
                pl.BlockSpec((Cout, KK * Cin), lambda m: (0, 0)),      # fetched once
                pl.BlockSpec((Cout, 1), lambda m: (0, 0)),             # fetched once
            ],
            out_specs=pl.BlockSpec((Cout, Tm), lambda m: (0, m)),      # lane-dense stores
            scratch_shapes=[
                pltpu.VMEM((Cin, Tm + Th), cd),        # stitched tile + halo
                pltpu.VMEM((KK * Cin, Tm), cd),        # im2col slab (GEMM RHS)
            ],
        ),
        compiler_params=pltpu.CompilerParams(
            # One "parallel" tile axis: many steps even at batch 1, so both
            # v7x TensorCores get work and the pipeline has depth.
            dimension_semantics=("parallel",),
            # Per-block working set is a few MiB even at Tm=2048 (slab is the
            # largest piece, KK*Cin*Tm*itemsize).  32 MiB is safe on every
            # generation (v7x: 64 MiB physical); sweep upward on v5e together
            # with tile_target_lanes.
            vmem_limit_bytes=vmem_limit_bytes,
        ),
    )(x_flat, x_flat, w_gemm, b2)

    # ---- crop (single consumer-side slice-copy) ------------------------------
    # The last k-1 columns of each padded row and the bottom padding rows hold
    # wrap-around garbage (their taps read into the next row / next image /
    # the tail zeros).  The crop to [:H, :W] discards exactly that region;
    # do NOT fuse it away unless stride/dilation stays 1 / padding stays 'same'.
    out = (out_flat[:, :G_out]
           .reshape(Cout, N, Hp, Wp)[:, :, :H, :W]
           .transpose(1, 0, 2, 3))
    return out


if __name__ == "__main__":
    # Small shapes consistent with the module: (batch, c_in, H, H)
    batch, c_in, c_out, H, ksz = 2, 4, 8, 16, 3

    eq_indices = get_equivariance_indices(ksz, ["rot90"])
    num_params = max(eq_indices) + 1                    # 3 for a 3x3 rot90 kernel

    # Deterministic parameter init (same distribution as reset_parameters)
    n = c_in * c_out * ksz * ksz
    stdv = 1.0 / math.sqrt(n)
    key = jax.random.PRNGKey(0)
    kw, kb, kx = jax.random.split(key, 3)
    weight = jax.random.uniform(kw, (c_in, c_out, num_params),
                                minval=-stdv, maxval=stdv, dtype=jnp.float32)
    bias = jax.random.uniform(kb, (c_out,),
                              minval=-stdv, maxval=stdv, dtype=jnp.float32)
    x = jax.random.normal(kx, (batch, c_in, H, H), dtype=jnp.float32)

    # Pure-JAX reference of the exact torch semantics (conv2d 'same' + bias)
    w_full = expand_weight(weight, eq_indices, c_in, c_out, ksz)
    ref = jax.lax.conv_general_dilated(
        x, w_full, window_strides=(1, 1), padding="SAME",
        dimension_numbers=("NCHW", "OIHW", "NCHW"),
    ) + bias.reshape(1, c_out, 1, 1)

    # f32 path: exact module semantics.
    out = gconv2d_forward(x, weight, bias, eq_indices, ksz)
    out = jax.block_until_ready(out)
    assert out.shape == (batch, c_out, H, H)
    assert jnp.allclose(out, ref, rtol=1e-4, atol=1e-4)

    # bf16 compute path (v6e/v7x-friendly: half the input HBM bytes, native
    # MXU rate) with f32 accumulation and f32 bias — looser tolerance.
    out_bf16 = gconv2d_forward(x, weight, bias, eq_indices, ksz,
                               compute_dtype=jnp.bfloat16)
    out_bf16 = jax.block_until_ready(out_bf16)
    assert jnp.allclose(out_bf16, ref, rtol=3e-2, atol=3e-2)

    print("KERNEL_OK")
</pallas_src>

<mosaic_0001>
module attributes {stable_mosaic.version = 11 : i64} {
  func.func @kernel(%arg0: i32, %arg1: memref<4x384xf32, #tpu.memory_space<vmem>>, %arg2: memref<4x128xf32, #tpu.memory_space<vmem>>, %arg3: memref<8x36xf32, #tpu.memory_space<vmem>>, %arg4: memref<8x1xf32, #tpu.memory_space<vmem>>, %arg5: memref<8x384xf32, #tpu.memory_space<vmem>>, %arg6: memref<4x512xf32, #tpu.memory_space<vmem>>, %arg7: memref<36x384xf32, #tpu.memory_space<vmem>>) attributes {dimension_semantics = [#tpu.dimension_semantics<parallel>], iteration_bounds = array<i64: 2>, scalar_prefetch = 0 : i64, scratch_operands = 2 : i64, tpu.core_type = #tpu.core_type<tc>, window_params = [{transform_indices = @transform_0, window_bounds = array<i64: 4, 384>}, {transform_indices = @transform_1, window_bounds = array<i64: 4, 128>}, {pipeline_mode = #tpu.pipeline_mode<synchronous>, transform_indices = @transform_2, window_bounds = array<i64: 8, 36>}, {pipeline_mode = #tpu.pipeline_mode<synchronous>, transform_indices = @transform_3, window_bounds = array<i64: 8, 1>}, {transform_indices = @transform_4, window_bounds = array<i64: 8, 384>}]} {
    %c0 = arith.constant 0 : index
    %c0_0 = arith.constant 0 : index
    %0 = vector.load %arg1[%c0, %c0_0] : memref<4x384xf32, #tpu.memory_space<vmem>>, vector<4x384xf32>
    %c0_1 = arith.constant 0 : index
    %c0_2 = arith.constant 0 : index
    %1 = vector.load %arg6[%c0_1, %c0_2] : memref<4x512xf32, #tpu.memory_space<vmem>>, vector<4x384xf32>
    tpu.vector_store %arg6[%c0_1, %c0_2], %0 {strides = array<i32>} : memref<4x512xf32, #tpu.memory_space<vmem>>, vector<4x384xf32>,
    %c0_3 = arith.constant 0 : index
    %c0_4 = arith.constant 0 : index
    %2 = vector.load %arg2[%c0_3, %c0_4] : memref<4x128xf32, #tpu.memory_space<vmem>>, vector<4x128xf32>
    %c0_5 = arith.constant 0 : index
    %c384 = arith.constant 384 : index
    %3 = vector.load %arg6[%c0_5, %c384] : memref<4x512xf32, #tpu.memory_space<vmem>>, vector<4x128xf32>
    tpu.vector_store %arg6[%c0_5, %c384], %2 {strides = array<i32>} : memref<4x512xf32, #tpu.memory_space<vmem>>, vector<4x128xf32>,
    %c0_6 = arith.constant 0 : index
    %c0_7 = arith.constant 0 : index
    %4 = vector.load %arg6[%c0_6, %c0_7] : memref<4x512xf32, #tpu.memory_space<vmem>>, vector<4x384xf32>
    %c0_8 = arith.constant 0 : index
    %c0_9 = arith.constant 0 : index
    %5 = vector.load %arg7[%c0_8, %c0_9] : memref<36x384xf32, #tpu.memory_space<vmem>>, vector<4x384xf32>
    tpu.vector_store %arg7[%c0_8, %c0_9], %4 {strides = array<i32>} : memref<36x384xf32, #tpu.memory_space<vmem>>, vector<4x384xf32>,
    %c0_10 = arith.constant 0 : index
    %c1 = arith.constant 1 : index
    %6 = vector.load %arg6[%c0_10, %c1] : memref<4x512xf32, #tpu.memory_space<vmem>>, vector<4x384xf32>
    %c4 = arith.constant 4 : index
    %c0_11 = arith.constant 0 : index
    %7 = vector.load %arg7[%c4, %c0_11] : memref<36x384xf32, #tpu.memory_space<vmem>>, vector<4x384xf32>
    tpu.vector_store %arg7[%c4, %c0_11], %6 {strides = array<i32>} : memref<36x384xf32, #tpu.memory_space<vmem>>, vector<4x384xf32>,
    %c0_12 = arith.constant 0 : index
    %c2 = arith.constant 2 : index
    %8 = vector.load %arg6[%c0_12, %c2] : memref<4x512xf32, #tpu.memory_space<vmem>>, vector<4x384xf32>
    %c8 = arith.constant 8 : index
    %c0_13 = arith.constant 0 : index
    %9 = vector.load %arg7[%c8, %c0_13] : memref<36x384xf32, #tpu.memory_space<vmem>>, vector<4x384xf32>
    tpu.vector_store %arg7[%c8, %c0_13], %8 {strides = array<i32>} : memref<36x384xf32, #tpu.memory_space<vmem>>, vector<4x384xf32>,
    %c0_14 = arith.constant 0 : index
    %c18 = arith.constant 18 : index
    %10 = vector.load %arg6[%c0_14, %c18] : memref<4x512xf32, #tpu.memory_space<vmem>>, vector<4x384xf32>
    %c12 = arith.constant 12 : index
    %c0_15 = arith.constant 0 : index
    %11 = vector.load %arg7[%c12, %c0_15] : memref<36x384xf32, #tpu.memory_space<vmem>>, vector<4x384xf32>
    tpu.vector_store %arg7[%c12, %c0_15], %10 {strides = array<i32>} : memref<36x384xf32, #tpu.memory_space<vmem>>, vector<4x384xf32>,
    %c0_16 = arith.constant 0 : index
    %c19 = arith.constant 19 : index
    %12 = vector.load %arg6[%c0_16, %c19] : memref<4x512xf32, #tpu.memory_space<vmem>>, vector<4x384xf32>
    %c16 = arith.constant 16 : index
    %c0_17 = arith.constant 0 : index
    %13 = vector.load %arg7[%c16, %c0_17] : memref<36x384xf32, #tpu.memory_space<vmem>>, vector<4x384xf32>
    tpu.vector_store %arg7[%c16, %c0_17], %12 {strides = array<i32>} : memref<36x384xf32, #tpu.memory_space<vmem>>, vector<4x384xf32>,
    %c0_18 = arith.constant 0 : index
    %c20 = arith.constant 20 : index
    %14 = vector.load %arg6[%c0_18, %c20] : memref<4x512xf32, #tpu.memory_space<vmem>>, vector<4x384xf32>
    %c20_19 = arith.constant 20 : index
    %c0_20 = arith.constant 0 : index
    %15 = vector.load %arg7[%c20_19, %c0_20] : memref<36x384xf32, #tpu.memory_space<vmem>>, vector<4x384xf32>
    tpu.vector_store %arg7[%c20_19, %c0_20], %14 {strides = array<i32>} : memref<36x384xf32, #tpu.memory_space<vmem>>, vector<4x384xf32>,
    %c0_21 = arith.constant 0 : index
    %c36 = arith.constant 36 : index
    %16 = vector.load %arg6[%c0_21, %c36] : memref<4x512xf32, #tpu.memory_space<vmem>>, vector<4x384xf32>
    %c24 = arith.constant 24 : index
    %c0_22 = arith.constant 0 : index
    %17 = vector.load %arg7[%c24, %c0_22] : memref<36x384xf32, #tpu.memory_space<vmem>>, vector<4x384xf32>
    tpu.vector_store %arg7[%c24, %c0_22], %16 {strides = array<i32>} : memref<36x384xf32, #tpu.memory_space<vmem>>, vector<4x384xf32>,
    %c0_23 = arith.constant 0 : index
    %c37 = arith.constant 37 : index
    %18 = vector.load %arg6[%c0_23, %c37] : memref<4x512xf32, #tpu.memory_space<vmem>>, vector<4x384xf32>
    %c28 = arith.constant 28 : index
    %c0_24 = arith.constant 0 : index
    %19 = vector.load %arg7[%c28, %c0_24] : memref<36x384xf32, #tpu.memory_space<vmem>>, vector<4x384xf32>
    tpu.vector_store %arg7[%c28, %c0_24], %18 {strides = array<i32>} : memref<36x384xf32, #tpu.memory_space<vmem>>, vector<4x384xf32>,
    %c0_25 = arith.constant 0 : index
    %c38 = arith.constant 38 : index
    %20 = vector.load %arg6[%c0_25, %c38] : memref<4x512xf32, #tpu.memory_space<vmem>>, vector<4x384xf32>
    %c32 = arith.constant 32 : index
    %c0_26 = arith.constant 0 : index
    %21 = vector.load %arg7[%c32, %c0_26] : memref<36x384xf32, #tpu.memory_space<vmem>>, vector<4x384xf32>
    tpu.vector_store %arg7[%c32, %c0_26], %20 {strides = array<i32>} : memref<36x384xf32, #tpu.memory_space<vmem>>, vector<4x384xf32>,
    %c0_27 = arith.constant 0 : index
    %c0_28 = arith.constant 0 : index
    %22 = vector.load %arg3[%c0_27, %c0_28] : memref<8x36xf32, #tpu.memory_space<vmem>>, vector<8x36xf32>
    %c0_29 = arith.constant 0 : index
    %c0_30 = arith.constant 0 : index
    %23 = vector.load %arg7[%c0_29, %c0_30] : memref<36x384xf32, #tpu.memory_space<vmem>>, vector<36x384xf32>
    %cst = arith.constant dense<0.000000e+00> : vector<8x384xf32>
    %24 = tpu.matmul %22, %23, %cst {dimension_numbers = #tpu.dot_dimension_numbers<[1], [0], [0], [1], [0, 0, 1, 1], [], []>} : vector<8x36xf32>, vector<36x384xf32>, vector<8x384xf32> -> vector<8x384xf32>
    %c0_31 = arith.constant 0 : index
    %c0_32 = arith.constant 0 : index
    %25 = vector.load %arg4[%c0_31, %c0_32] : memref<8x1xf32, #tpu.memory_space<vmem>>, vector<8x1xf32>
    %26 = vector.broadcast %25 : vector<8x1xf32> to vector<8x384xf32>
    %27 = arith.addf %24, %26 : vector<8x384xf32>
    %c0_33 = arith.constant 0 : index
    %c0_34 = arith.constant 0 : index
    %28 = vector.load %arg5[%c0_33, %c0_34] : memref<8x384xf32, #tpu.memory_space<vmem>>, vector<8x384xf32>
    tpu.vector_store %arg5[%c0_33, %c0_34], %27 {strides = array<i32>} : memref<8x384xf32, #tpu.memory_space<vmem>>, vector<8x384xf32>,
    return
  }
  func.func @transform_0(%arg0: i32) -> (i32, i32) {
    %c0_i32 = arith.constant 0 : i32
    %c0_i32_0 = arith.constant 0 : i32
    return %c0_i32, %arg0 : i32, i32
  }
  func.func @transform_1(%arg0: i32) -> (i32, i32) {
    %c1_i32 = arith.constant 1 : i32
    %0 = arith.addi %arg0, %c1_i32 : i32
    %c3_i32 = arith.constant 3 : i32
    %1 = arith.muli %0, %c3_i32 : i32
    %c0_i32 = arith.constant 0 : i32
    %c0_i32_0 = arith.constant 0 : i32
    return %c0_i32, %1 : i32, i32
  }
  func.func @transform_2(%arg0: i32) -> (i32, i32) {
    %c0_i32 = arith.constant 0 : i32
    %c0_i32_0 = arith.constant 0 : i32
    %c0_i32_1 = arith.constant 0 : i32
    return %c0_i32, %c0_i32_0 : i32, i32
  }
  func.func @transform_3(%arg0: i32) -> (i32, i32) {
    %c0_i32 = arith.constant 0 : i32
    %c0_i32_0 = arith.constant 0 : i32
    %c0_i32_1 = arith.constant 0 : i32
    return %c0_i32, %c0_i32_0 : i32, i32
  }
  func.func @transform_4(%arg0: i32) -> (i32, i32) {
    %c0_i32 = arith.constant 0 : i32
    %c0_i32_0 = arith.constant 0 : i32
    return %c0_i32, %arg0 : i32, i32
  }
}

</mosaic_0001>

<llo_original>
// kernel: tpu_custom_call.1
$region0: #{tpu_custom_call.1}
  #allocation0 [shape = 'u32[]', space=smem, size = 0x4, offset = 0x4, fixed_abs, tag = 'smem constant byte address 0x4 - core index']
  #allocation1 [shape = 'u32[144,128]{1,0:T(1,128)}', space=vmem, size = 0x12000, scoped, tag = 'internal scratch']
  #allocation2 [shape = 'f32[4,512]{1,0:T(4,128)}', space=vmem, size = 0x2000, scoped, tag = 'scratch operand']
  #allocation3 [shape = 'f32[36,384]{1,0:T(8,128)}', space=vmem, size = 0xf000, scoped, tag = 'scratch operand']
  %s0 = inlined_call_operand.hbm [shape: f32[4,896], index: 0, kind: input, shape index: {}]
  %s1 = inlined_call_operand.hbm [shape: f32[4,896], index: 1, kind: input, shape index: {}]
  %s2 = inlined_call_operand.vmem [shape: f32[8,36], index: 2, kind: input, shape index: {}]
  %s3 = inlined_call_operand.vmem [shape: f32[8,1], index: 3, kind: input, shape index: {}]
  %s4 = inlined_call_operand.hbm [shape: f32[8,768], index: 4, kind: output, shape index: {}]
  %s5 = sld [smem:[#allocation0]]
  $region57: #{tpu_custom_call.1} parent=0
    _
  %s7 = ssub.s32 1, %s5
  %s8 = scalar_select 0, %s7, %s5
  $region1: #{tpu_custom_call.1} parent=0
    #allocation4 [shape = 'u8[12288]{0}', space=vmem, size = 0x3000, scoped, tag = 'input window, operand 0']
    #allocation5 [shape = 's32[2]{0}', space=sflag, size = 0x8, scoped, tag = 'scoped memory for tpu_custom_call.1']
    #allocation6 [shape = 's32[2]{0}', space=sflag, size = 0x8, scoped, tag = 'scoped memory for tpu_custom_call.1']
    #allocation7 [shape = 'u8[4096]{0}', space=vmem, size = 0x1000, scoped, tag = 'input window, operand 1']
    #allocation8 [shape = 's32[2]{0}', space=sflag, size = 0x8, scoped, tag = 'scoped memory for tpu_custom_call.1']
    #allocation9 [shape = 'u8[24576]{0}', space=vmem, size = 0x6000, scoped, tag = 'output window, operand 0']
    %9 = vsyncpa [#allocation5], 0
    %s10 = scalar_lea.sflag [#allocation5], 1
    %11 = vsyncpa %s10, 0
    %12 = vsyncpa [#allocation8], 0
    %s13 = scalar_lea.sflag [#allocation8], 1
    %14 = vsyncpa %s13, 0
    %15 = vsyncpa [#allocation6], 0
    %s16 = scalar_lea.sflag [#allocation6], 1
    %17 = vsyncpa %s16, 0
    loop: start=0, step=1, limit=4
    $region2: #{tpu_custom_call.1} parent=1 // loop_pre_header
      _
    $region3: #{tpu_custom_call.1} parent=1 // loop_header
      %s19 = sphi 0, %s23
      %p20 = scmp.ge.s32.totalorder %s19, 4
      %s29 = sphi 0, %s31
      %s32 = sphi 0, %s29
      %s33 = sphi 0, %s32
      %s49 = sphi 0, %s33
      %s59 = sphi 0, %s61
      %s62 = sphi 0, %s59
      %s63 = sphi 0, %s62
      %s79 = sphi 0, %s63
      %s83 = sphi 0, %s83
      %s85 = sphi 0, %s83
      %s86 = sphi 0, %s85
      %s100 = sphi 0, %s86
      %s104 = sphi 0, %s104
      %s106 = sphi 0, %s104
      %s107 = sphi 0, %s106
      %s121 = sphi 0, %s107
      %s127 = sphi 0, %s129
      %s130 = sphi 0, %s127
      %s131 = sphi 0, %s130
      %s147 = sphi 0, %s131
    $region4: #{tpu_custom_call.1} parent=1 // loop_header_branch
      %22 = sbr.rel (%p20) target = $region8
    $region5: #{tpu_custom_call.1} parent=1 // loop_body
      %s24 = ssub.s32 %s19, 1
      %s25 = ssub.s32 %s19, 2
      %s26 = sadd.s32 %s19, 1
      %s27 = ssub.s32 %s19, %s26
      %p28 = scmp.eq.s32.totalorder %s27, 0
      %s30 = sadd.s32 %s29, 1
      %s31 = scalar_select %p28, %s29, %s30
      %p34 = pneg %p28
      %p35 = scmp.eq.s32.totalorder %s19, 1
      %p36 = por %p34, %p35
      %p37 = scmp.ne.s32.totalorder %s29, %s32
      %p38 = scmp.eq.s32.totalorder %s19, 0
      %p39 = por %p37, %p38
      %p40 = scmp.ne.s32.totalorder %s29, %s32
      %p41 = scmp.eq.s32.totalorder %s24, 1
      %p42 = por %p40, %p41
      %p43 = scmp.ne.s32.totalorder %s32, %s33
      %p44 = scmp.eq.s32.totalorder %s24, 0
      %p45 = por %p43, %p44
      %p46 = scmp.ne.s32.totalorder %s32, %s33
      %p47 = scmp.eq.s32.totalorder %s25, 1
      %p48 = por %p46, %p47
      %p50 = scmp.ne.s32.totalorder %s33, %s49
      %p51 = scmp.eq.s32.totalorder %s25, 0
      %p52 = por %p50, %p51
      %s53 = sadd.s32 %s19, 1
      %s54 = smul.u32 %s53, 3
      %s55 = sadd.s32 %s26, 1
      %s56 = smul.u32 %s55, 3
      %s57 = ssub.s32 %s54, %s56
      %p58 = scmp.eq.s32.totalorder %s57, 0
      %s60 = sadd.s32 %s59, 1
      %s61 = scalar_select %p58, %s59, %s60
      %p64 = pneg %p58
      %p65 = scmp.eq.s32.totalorder %s19, 1
      %p66 = por %p64, %p65
      %p67 = scmp.ne.s32.totalorder %s59, %s62
      %p68 = scmp.eq.s32.totalorder %s19, 0
      %p69 = por %p67, %p68
      %p70 = scmp.ne.s32.totalorder %s59, %s62
      %p71 = scmp.eq.s32.totalorder %s24, 1
      %p72 = por %p70, %p71
      %p73 = scmp.ne.s32.totalorder %s62, %s63
      %p74 = scmp.eq.s32.totalorder %s24, 0
      %p75 = por %p73, %p74
      %p76 = scmp.ne.s32.totalorder %s62, %s63
      %p77 = scmp.eq.s32.totalorder %s25, 1
      %p78 = por %p76, %p77
      %p80 = scmp.ne.s32.totalorder %s63, %s79
      %p81 = scmp.eq.s32.totalorder %s25, 0
      %p82 = por %p80, %p81
      %s84 = sadd.s32 %s83, 1
      %p87 = scmp.eq.s32.totalorder %s19, 1
      %p88 = scmp.ne.s32.totalorder %s83, %s85
      %p89 = scmp.eq.s32.totalorder %s19, 0
      %p90 = por %p88, %p89
      %p91 = scmp.ne.s32.totalorder %s83, %s85
      %p92 = scmp.eq.s32.totalorder %s24, 1
      %p93 = por %p91, %p92
      %p94 = scmp.ne.s32.totalorder %s85, %s86
      %p95 = scmp.eq.s32.totalorder %s24, 0
      %p96 = por %p94, %p95
      %p97 = scmp.ne.s32.totalorder %s85, %s86
      %p98 = scmp.eq.s32.totalorder %s25, 1
      %p99 = por %p97, %p98
      %p101 = scmp.ne.s32.totalorder %s86, %s100
      %p102 = scmp.eq.s32.totalorder %s25, 0
      %p103 = por %p101, %p102
      %s105 = sadd.s32 %s104, 1
      %p108 = scmp.eq.s32.totalorder %s19, 1
      %p109 = scmp.ne.s32.totalorder %s104, %s106
      %p110 = scmp.eq.s32.totalorder %s19, 0
      %p111 = por %p109, %p110
      %p112 = scmp.ne.s32.totalorder %s104, %s106
      %p113 = scmp.eq.s32.totalorder %s24, 1
      %p114 = por %p112, %p113
      %p115 = scmp.ne.s32.totalorder %s106, %s107
      %p116 = scmp.eq.s32.totalorder %s24, 0
      %p117 = por %p115, %p116
      %p118 = scmp.ne.s32.totalorder %s106, %s107
      %p119 = scmp.eq.s32.totalorder %s25, 1
      %p120 = por %p118, %p119
      %p122 = scmp.ne.s32.totalorder %s107, %s121
      %p123 = scmp.eq.s32.totalorder %s25, 0
      %p124 = por %p122, %p123
      %s125 = ssub.s32 %s19, %s26
      %p126 = scmp.eq.s32.totalorder %s125, 0
      %s128 = sadd.s32 %s127, 1
      %s129 = scalar_select %p126, %s127, %s128
      %p132 = pneg %p126
      %p133 = scmp.eq.s32.totalorder %s19, 1
      %p134 = por %p132, %p133
      %p135 = scmp.ne.s32.totalorder %s127, %s130
      %p136 = scmp.eq.s32.totalorder %s19, 0
      %p137 = por %p135, %p136
      %p138 = scmp.ne.s32.totalorder %s127, %s130
      %p139 = scmp.eq.s32.totalorder %s24, 1
      %p140 = por %p138, %p139
      %p141 = scmp.ne.s32.totalorder %s130, %s131
      %p142 = scmp.eq.s32.totalorder %s24, 0
      %p143 = por %p141, %p142
      %p144 = scmp.ne.s32.totalorder %s130, %s131
      %p145 = scmp.eq.s32.totalorder %s25, 1
      %p146 = por %p144, %p145
      %p148 = scmp.ne.s32.totalorder %s131, %s147
      %p149 = scmp.eq.s32.totalorder %s25, 0
      %p150 = por %p148, %p149
      %p151 = scmp.le.s32.totalorder 1, %s19
      %p152 = scmp.lt.s32.totalorder %s19, 3
      %p153 = pnand %p151, %p152
      %p154 = pneg %p153
      // Predicated region
      $region9: #{tpu_custom_call.1} parent=5 // pred_check
        _
      $region10: #{tpu_custom_call.1} parent=5 // pred_check_branch
        %156 = sbr.rel (%p153) target = $region12
      $region11: #{tpu_custom_call.1} parent=5 // pred_region
        %s157 = ssub.s32 %s19, 1
        // Predicated region
        $region13: #{tpu_custom_call.1} parent=11 // pred_check
          %p158 = pneg %p96
        $region14: #{tpu_custom_call.1} parent=11 // pred_check_branch
          %160 = sbr.rel (%p158) target = $region16
        $region15: #{tpu_custom_call.1} parent=11 // pred_region
          _
        $region16: #{tpu_custom_call.1} parent=11 // pred_fallthru
          _
        // Predicated region
        $region17: #{tpu_custom_call.1} parent=11 // pred_check
          %p161 = pneg %p117
        $region18: #{tpu_custom_call.1} parent=11 // pred_check_branch
          %163 = sbr.rel (%p161) target = $region20
        $region19: #{tpu_custom_call.1} parent=11 // pred_region
          _
        $region20: #{tpu_custom_call.1} parent=11 // pred_fallthru
          _
      $region12: #{tpu_custom_call.1} parent=5 // pred_fallthru
        _
      %p164 = scmp.lt.s32.totalorder %s19, 2
      // Predicated region
      $region21: #{tpu_custom_call.1} parent=5 // pred_check
        %p165 = pneg %p164
      $region22: #{tpu_custom_call.1} parent=5 // pred_check_branch
        %167 = sbr.rel (%p165) target = $region24
      $region23: #{tpu_custom_call.1} parent=5 // pred_region
        // Predicated region
        $region25: #{tpu_custom_call.1} parent=23 // pred_check
          %p168 = pneg %p39
        $region26: #{tpu_custom_call.1} parent=23 // pred_check_branch
          %170 = sbr.rel (%p168) target = $region28
        $region27: #{tpu_custom_call.1} parent=23 // pred_region
          %s171 = sand.u32 %s29, 1
          %s172 = scalar_lea.sflag [#allocation5], %s171
          %s173 = sand.u32 %s29, 1
          %s174 = smul.addr %s173, 12
          %s175 = scalar_lea.vmem [#allocation4], %s174
          %s176 = smul.u32 3, %s19
          %s177 = ssub.s32 7, %s176
          %p178 = scmp.lt.s32.totalorder %s177, 3
          %s179 = scalar_select %p178, %s177, 3
          %s180 = smul.u32 64, %s179
          %s182 = ssub.s32 192, %s180
          %183 = vsyncadd %s172, %s182
          %p184 = scmp.ne.s32.totalorder 0, %s180
          %s185 = smul.addr %s176, 64
          %s186 = scalar_lea.hbm %s0, %s185
          %s187 = smul.u32 %s179, 4
          %s188 = sshll.u32 %s187, 4
          %s189 = sshll.u32 %s175, 4
          %s190 = int_to_ptr.vmem [resolvable:$true] %s189
          %192 = dma.hbm_to_vmem [thread:$0]  (%p184), %s186, %s188, %s190, %s172
        $region28: #{tpu_custom_call.1} parent=23 // pred_fallthru
          _
        // Predicated region
        $region29: #{tpu_custom_call.1} parent=23 // pred_check
          %p193 = pneg %p69
        $region30: #{tpu_custom_call.1} parent=23 // pred_check_branch
          %195 = sbr.rel (%p193) target = $region32
        $region31: #{tpu_custom_call.1} parent=23 // pred_region
          %s196 = sand.u32 %s59, 1
          %s197 = scalar_lea.sflag [#allocation8], %s196
          %s198 = sand.u32 %s59, 1
          %s199 = smul.addr %s198, 4
          %s200 = scalar_lea.vmem [#allocation7], %s199
          %s201 = sadd.s32 %s19, 1
          %s202 = smul.u32 %s201, 3
          %s204 = ssub.s32 64, 64
          %205 = vsyncadd %s197, %s204
          %s206 = smul.addr %s202, 64
          %s207 = scalar_lea.hbm %s1, %s206
          %s209 = sshll.u32 %s200, 4
          %s210 = int_to_ptr.vmem [resolvable:$true] %s209
          %212 = dma.hbm_to_vmem [thread:$0]  %s207, 64, %s210, %s197
        $region32: #{tpu_custom_call.1} parent=23 // pred_fallthru
          _
      $region24: #{tpu_custom_call.1} parent=5 // pred_fallthru
        _
      %p213 = scmp.le.s32.totalorder 1, %s19
      %p214 = scmp.lt.s32.totalorder %s19, 3
      %p215 = pnand %p213, %p214
      %p216 = pneg %p215
      // Predicated region
      $region33: #{tpu_custom_call.1} parent=5 // pred_check
        _
      $region34: #{tpu_custom_call.1} parent=5 // pred_check_branch
        %218 = sbr.rel (%p215) target = $region36
      $region35: #{tpu_custom_call.1} parent=5 // pred_region
        %s219 = ssub.s32 %s19, 1
        %s220 = sand.u32 %s32, 1
        %s221 = scalar_lea.sflag [#allocation5], %s220
        %s222 = sand.u32 %s32, 1
        %s223 = smul.addr %s222, 12
        %s224 = scalar_lea.vmem [#allocation4], %s223
        // Predicated region
        $region37: #{tpu_custom_call.1} parent=35 // pred_check
          %p225 = pneg %p45
        $region38: #{tpu_custom_call.1} parent=35 // pred_check_branch
          %227 = sbr.rel (%p225) target = $region40
        $region39: #{tpu_custom_call.1} parent=35 // pred_region
          %228 = dma.done %s221, 192
        $region40: #{tpu_custom_call.1} parent=35 // pred_fallthru
          _
        %s229 = sand.u32 %s62, 1
        %s230 = scalar_lea.sflag [#allocation8], %s229
        %s231 = sand.u32 %s62, 1
        %s232 = smul.addr %s231, 4
        %s233 = scalar_lea.vmem [#allocation7], %s232
        // Predicated region
        $region41: #{tpu_custom_call.1} parent=35 // pred_check
          %p234 = pneg %p75
        $region42: #{tpu_custom_call.1} parent=35 // pred_check_branch
          %236 = sbr.rel (%p234) target = $region44
        $region43: #{tpu_custom_call.1} parent=35 // pred_region
          %237 = dma.done %s230, 64
        $region44: #{tpu_custom_call.1} parent=35 // pred_fallthru
          _
        %s238 = sand.u32 %s32, 1
        %s239 = scalar_lea.sflag [#allocation5], %s238
        %s240 = sand.u32 %s32, 1
        %s241 = smul.addr %s240, 12
        %s242 = scalar_lea.vmem [#allocation4], %s241
        %p243 = pneg %p45
        %p244 = pneg %p42
        %s245 = sand.u32 %s62, 1
        %s246 = scalar_lea.sflag [#allocation8], %s245
        %s247 = sand.u32 %s62, 1
        %s248 = smul.addr %s247, 4
        %s249 = scalar_lea.vmem [#allocation7], %s248
        %p250 = pneg %p75
        %p251 = pneg %p72
        %p252 = pneg %p96
        %p253 = pneg %p93
        %p254 = pneg %p117
        %p255 = pneg %p114
        %p256 = pneg %p143
        %p257 = pneg %p140
        %s258 = sand.u32 %s130, 1
        %s259 = scalar_lea.sflag [#allocation6], %s258
        %s260 = sand.u32 %s130, 1
        %s261 = smul.addr %s260, 24
        %s262 = scalar_lea.vmem [#allocation9], %s261
        %s263 = smul.u32 3, %s24
        %s264 = ssub.s32 7, %s263
        %p265 = scmp.lt.s32.totalorder %s264, 3
        %s266 = scalar_select %p265, %s264, 3
        %s267 = smul.u32 64, %s266
        %s268 = sadd.s32 %s24, 1
        %s269 = smul.u32 %s268, 3
        %s270 = smul.u32 3, %s24
        %v271 = vld [vmem:[%s224] sm:$0xff]
        %v272 = vld [vmem:[%s224 + $0x8] sm:$0xf]
        %273 = vst [vmem:[#allocation2] sm:$0xff] %v271
        %274 = vst [vmem:[#allocation2 + $0x8] sm:$0xf] %v272
        %v275 = vld [vmem:[%s233] sm:$0xf]
        %276 = vst [vmem:[#allocation2 + $0xc] sm:$0xf] %v275
        %v277 = vld [vmem:[#allocation2] sm:$0xff]
        %v278 = vld [vmem:[#allocation2 + $0x8] sm:$0xf]
        %v280 = vcombine.high %v277, %v277
        %282 = vst [vmem:[#allocation3] sm:$0xf] %v277
        %283 = vst [vmem:[#allocation3 + $0x8] sm:$0xf] %v280
        %284 = vst [vmem:[#allocation3 + $0x10] sm:$0xf] %v278
        %v285 = vld [vmem:[#allocation2] sm:$0xff]
        %v286 = vld [vmem:[#allocation2 + $0x8] sm:$0xff]
        %v289 = vcombine.low %v285, %v285
        %v290 = vcombine.low %v286, %v286
        %291 = vrot.lane.b32.xlu0 %v289, 127
        %v292 = vpop.permute.xlu0 %291
        %293 = vrot.lane.b32.xlu0 %v285, 127
        %v294 = vpop.permute.xlu0 %293
        %295 = vrot.lane.b32.xlu0 %v290, 127
        %v296 = vpop.permute.xlu0 %295
        %297 = vrot.lane.b32.xlu0 %v286, 127
        %v298 = vpop.permute.xlu0 %297
        %vm299 = vcmask 1039360
        %v300 = vsel %vm299, %v292, %v294
        %v301 = vsel %vm299, %v294, %v296
        %v302 = vsel %vm299, %v296, %v298
        %306 = vst [vmem:[#allocation3] sm:$0xf0] %v300
        %307 = vst [vmem:[#allocation3 + $0x8] sm:$0xf0] %v301
        %308 = vst [vmem:[#allocation3 + $0x10] sm:$0xf0] %v302
        %v309 = vld [vmem:[#allocation2] sm:$0xff]
        %v310 = vld [vmem:[#allocation2 + $0x8] sm:$0xff]
        %v313 = vcombine.high %v309, %v309
        %v314 = vcombine.high %v310, %v310
        %315 = vrot.lane.b32.xlu0 %v309, 126
        %v316 = vpop.permute.xlu0 %315
        %317 = vrot.lane.b32.xlu0 %v313, 126
        %v318 = vpop.permute.xlu0 %317
        %319 = vrot.lane.b32.xlu0 %v310, 126
        %v320 = vpop.permute.xlu0 %319
        %321 = vrot.lane.b32.xlu0 %v314, 126
        %v322 = vpop.permute.xlu0 %321
        %vm323 = vcmask 1031168
        %v324 = vsel %vm323, %v316, %v318
        %v325 = vsel %vm323, %v318, %v320
        %v326 = vsel %vm323, %v320, %v322
        %330 = vst [vmem:[#allocation3 + $0x18] sm:$0xf] %v324
        %331 = vst [vmem:[#allocation3 + $0x20] sm:$0xf] %v325
        %332 = vst [vmem:[#allocation3 + $0x28] sm:$0xf] %v326
        %v333 = vld [vmem:[#allocation2] sm:$0xff]
        %v334 = vld [vmem:[#allocation2 + $0x8] sm:$0xff]
        %v337 = vcombine.low %v333, %v333
        %v338 = vcombine.low %v334, %v334
        %339 = vrot.lane.b32.xlu0 %v337, 110
        %v340 = vpop.permute.xlu0 %339
        %341 = vrot.lane.b32.xlu0 %v333, 110
        %v342 = vpop.permute.xlu0 %341
        %343 = vrot.lane.b32.xlu0 %v338, 110
        %v344 = vpop.permute.xlu0 %343
        %345 = vrot.lane.b32.xlu0 %v334, 110
        %v346 = vpop.permute.xlu0 %345
        %vm347 = vcmask 900096
        %v348 = vsel %vm347, %v340, %v342
        %v349 = vsel %vm347, %v342, %v344
        %v350 = vsel %vm347, %v344, %v346
        %354 = vst [vmem:[#allocation3 + $0x18] sm:$0xf0] %v348
        %355 = vst [vmem:[#allocation3 + $0x20] sm:$0xf0] %v349
        %356 = vst [vmem:[#allocation3 + $0x28] sm:$0xf0] %v350
        %v357 = vld [vmem:[#allocation2] sm:$0xff]
        %v358 = vld [vmem:[#allocation2 + $0x8] sm:$0xff]
        %v361 = vcombine.high %v357, %v357
        %v362 = vcombine.high %v358, %v358
        %363 = vrot.lane.b32.xlu0 %v357, 109
        %v364 = vpop.permute.xlu0 %363
        %365 = vrot.lane.b32.xlu0 %v361, 109
        %v366 = vpop.permute.xlu0 %365
        %367 = vrot.lane.b32.xlu0 %v358, 109
        %v368 = vpop.permute.xlu0 %367
        %369 = vrot.lane.b32.xlu0 %v362, 109
        %v370 = vpop.permute.xlu0 %369
        %vm371 = vcmask 891904
        %v372 = vsel %vm371, %v364, %v366
        %v373 = vsel %vm371, %v366, %v368
        %v374 = vsel %vm371, %v368, %v370
        %378 = vst [vmem:[#allocation3 + $0x30] sm:$0xf] %v372
        %379 = vst [vmem:[#allocation3 + $0x38] sm:$0xf] %v373
        %380 = vst [vmem:[#allocation3 + $0x40] sm:$0xf] %v374
        %v381 = vld [vmem:[#allocation2] sm:$0xff]
        %v382 = vld [vmem:[#allocation2 + $0x8] sm:$0xff]
        %v385 = vcombine.low %v381, %v381
        %v386 = vcombine.low %v382, %v382
        %387 = vrot.lane.b32.xlu0 %v385, 108
        %v388 = vpop.permute.xlu0 %387
        %389 = vrot.lane.b32.xlu0 %v381, 108
        %v390 = vpop.permute.xlu0 %389
        %391 = vrot.lane.b32.xlu0 %v386, 108
        %v392 = vpop.permute.xlu0 %391
        %393 = vrot.lane.b32.xlu0 %v382, 108
        %v394 = vpop.permute.xlu0 %393
        %vm395 = vcmask 883712
        %v396 = vsel %vm395, %v388, %v390
        %v397 = vsel %vm395, %v390, %v392
        %v398 = vsel %vm395, %v392, %v394
        %402 = vst [vmem:[#allocation3 + $0x30] sm:$0xf0] %v396
        %403 = vst [vmem:[#allocation3 + $0x38] sm:$0xf0] %v397
        %404 = vst [vmem:[#allocation3 + $0x40] sm:$0xf0] %v398
        %v405 = vld [vmem:[#allocation2] sm:$0xff]
        %v406 = vld [vmem:[#allocation2 + $0x8] sm:$0xff]
        %v409 = vcombine.high %v405, %v405
        %v410 = vcombine.high %v406, %v406
        %411 = vrot.lane.b32.xlu0 %v405, 92
        %v412 = vpop.permute.xlu0 %411
        %413 = vrot.lane.b32.xlu0 %v409, 92
        %v414 = vpop.permute.xlu0 %413
        %415 = vrot.lane.b32.xlu0 %v406, 92
        %v416 = vpop.permute.xlu0 %415
        %417 = vrot.lane.b32.xlu0 %v410, 92
        %v418 = vpop.permute.xlu0 %417
        %vm419 = vcmask 752640
        %v420 = vsel %vm419, %v412, %v414
        %v421 = vsel %vm419, %v414, %v416
        %v422 = vsel %vm419, %v416, %v418
        %426 = vst [vmem:[#allocation3 + $0x48] sm:$0xf] %v420
        %427 = vst [vmem:[#allocation3 + $0x50] sm:$0xf] %v421
        %428 = vst [vmem:[#allocation3 + $0x58] sm:$0xf] %v422
        %v429 = vld [vmem:[#allocation2] sm:$0xff]
        %v430 = vld [vmem:[#allocation2 + $0x8] sm:$0xff]
        %v433 = vcombine.low %v429, %v429
        %v434 = vcombine.low %v430, %v430
        %435 = vrot.lane.b32.xlu0 %v433, 91
        %v436 = vpop.permute.xlu0 %435
        %437 = vrot.lane.b32.xlu0 %v429, 91
        %v438 = vpop.permute.xlu0 %437
        %439 = vrot.lane.b32.xlu0 %v434, 91
        %v440 = vpop.permute.xlu0 %439
        %441 = vrot.lane.b32.xlu0 %v430, 91
        %v442 = vpop.permute.xlu0 %441
        %vm443 = vcmask 744448
        %v444 = vsel %vm443, %v436, %v438
        %v445 = vsel %vm443, %v438, %v440
        %v446 = vsel %vm443, %v440, %v442
        %450 = vst [vmem:[#allocation3 + $0x48] sm:$0xf0] %v444
        %451 = vst [vmem:[#allocation3 + $0x50] sm:$0xf0] %v445
        %452 = vst [vmem:[#allocation3 + $0x58] sm:$0xf0] %v446
        %v453 = vld [vmem:[#allocation2] sm:$0xff]
        %v454 = vld [vmem:[#allocation2 + $0x8] sm:$0xff]
        %v457 = vcombine.high %v453, %v453
        %v458 = vcombine.high %v454, %v454
        %459 = vrot.lane.b32.xlu0 %v453, 90
        %v460 = vpop.permute.xlu0 %459
        %461 = vrot.lane.b32.xlu0 %v457, 90
        %v462 = vpop.permute.xlu0 %461
        %463 = vrot.lane.b32.xlu0 %v454, 90
        %v464 = vpop.permute.xlu0 %463
        %465 = vrot.lane.b32.xlu0 %v458, 90
        %v466 = vpop.permute.xlu0 %465
        %vm467 = vcmask 736256
        %v468 = vsel %vm467, %v460, %v462
        %v469 = vsel %vm467, %v462, %v464
        %v470 = vsel %vm467, %v464, %v466
        %474 = vst [vmem:[#allocation3 + $0x60] sm:$0xf] %v468
        %475 = vst [vmem:[#allocation3 + $0x68] sm:$0xf] %v469
        %476 = vst [vmem:[#allocation3 + $0x70] sm:$0xf] %v470
        %v477 = vld [vmem:[%s2] sm:$0xff]
        %v478 = vld [vmem:[#allocation3] sm:$0xff]
        %v479 = vld [vmem:[#allocation3 + $0x8] sm:$0xff]
        %v480 = vld [vmem:[#allocation3 + $0x10] sm:$0xff]
        %v481 = vld [vmem:[#allocation3 + $0x18] sm:$0xff]
        %v482 = vld [vmem:[#allocation3 + $0x20] sm:$0xff]
        %v483 = vld [vmem:[#allocation3 + $0x28] sm:$0xff]
        %v484 = vld [vmem:[#allocation3 + $0x30] sm:$0xff]
        %v485 = vld [vmem:[#allocation3 + $0x38] sm:$0xff]
        %v486 = vld [vmem:[#allocation3 + $0x40] sm:$0xff]
        %v487 = vld [vmem:[#allocation3 + $0x48] sm:$0xff]
        %v488 = vld [vmem:[#allocation3 + $0x50] sm:$0xff]
        %v489 = vld [vmem:[#allocation3 + $0x58] sm:$0xff]
        %v490 = vld [vmem:[#allocation3 + $0x60] sm:$0xf]
        %v491 = vld [vmem:[#allocation3 + $0x68] sm:$0xf]
        %v492 = vld [vmem:[#allocation3 + $0x70] sm:$0xf]
        %v493 = vld [vmem:[%s3] sm:$0xff]
        %495 = vset.pattern.permute.xlu0 0
        %496 = vperm.xlu0 %495, %v493
        %v497 = vpop.permute.xlu0 %496
        %vm499 = vcmask 293888
        %v501 = vsel %vm499, %v477, 0
        %vm503 = vcmask 1043456
        %v505 = vsel %vm503, %v490, 0
        %v508 = vsel %vm503, %v491, 0
        %v511 = vsel %vm503, %v492, 0
        %513 = vmatprep.subr.mxu0 %v479
        %514 = vmatpush1.msra.mxu0 %v478
        %515 = vmatprep.subr.mxu0 %v482
        %516 = vmatpush1.msra.mxu0 %v481
        %517 = vmatprep.subr.mxu0 %v485
        %518 = vmatpush1.msra.mxu0 %v484
        %519 = vmatprep.subr.mxu0 %v488
        %520 = vmatpush1.msra.mxu0 %v487
        %521 = vmatprep.subr.mxu0 %v508
        %522 = vmatpush1.msra.mxu0 %v505
        %523 = vmatprep.subr.mxu0 0.0
        %524 = vmatpush1.msra.mxu0 0.0
        %525 = vmatprep.subr.mxu0 0.0
        %526 = vmatpush1.msra.mxu0 0.0
        %527 = vmatprep.subr.mxu0 0.0
        %528 = vmatpush1.msra.mxu0 0.0
        %529 = vmatprep.subr.mxu0 0.0
        %530 = vmatpush1.msra.mxu0 0.0
        %531 = vmatprep.subr.mxu0 0.0
        %532 = vmatpush1.msra.mxu0 0.0
        %533 = vmatprep.subr.mxu0 0.0
        %534 = vmatpush1.msra.mxu0 0.0
        %535 = vmatprep.subr.mxu0 0.0
        %536 = vmatpush1.msra.mxu0 0.0
        %537 = vmatprep.subr.mxu0 0.0
        %538 = vmatpush1.msra.mxu0 0.0
        %539 = vmatprep.subr.mxu0 0.0
        %540 = vmatpush1.msra.mxu0 0.0
        %541 = vmatprep.subr.mxu0 0.0
        %542 = vmatpush1.msra.mxu0 0.0
        %543 = vmatprep.subr.mxu0 0.0
        %544 = vmatpush1.msra.mxu0 0.0
        %545 = vmatprep.subr.mxu0 0.0
        %546 = vmatpush1.msra.mxu0 0.0
        %547 = vmatprep.subr.mxu0 0.0
        %548 = vmatpush1.msra.mxu0 0.0
        %549 = vmatprep.subr.mxu0 0.0
        %550 = vmatpush1.msra.mxu0 0.0
        %551 = vmatprep.subr.mxu0 0.0
        %552 = vmatpush1.msra.mxu0 0.0
        %553 = vmatprep.subr.mxu0 0.0
        %554 = vmatpush1.msra.mxu0 0.0
        %555 = vmatprep.subr.mxu0 0.0
        %556 = vmatpush1.msra.mxu0 0.0
        %557 = vmatprep.subr.mxu0 0.0
        %558 = vmatpush1.msra.mxu0 0.0
        %559 = vmatprep.subr.mxu0 0.0
        %560 = vmatpush1.msra.mxu0 0.0
        %561 = vmatprep.subr.mxu0 0.0
        %562 = vmatpush1.msra.mxu0 0.0
        %563 = vmatprep.subr.mxu0 0.0
        %564 = vmatpush1.msra.mxu0 0.0
        %565 = vmatprep.subr.mxu0 0.0
        %566 = vmatpush1.msra.mxu0 0.0
        %567 = vmatprep.subr.mxu0 0.0
        %568 = vmatpush1.msra.mxu0 0.0
        %569 = vmatprep.subr.mxu0 0.0
        %570 = vmatpush1.msra.mxu0 0.0
        %571 = vmatprep.subr.mxu0 0.0
        %572 = vmatpush1.msra.mxu0 0.0
        %573 = vmatprep.subr.mxu0 0.0
        %574 = vmatpush1.msra.mxu0 0.0
        %575 = vmatprep.subr.mxu0 0.0
        %576 = vmatpush1.msra.mxu0 0.0
        %577 = vmatprep.mubr.f32.mxu0 0.0
        %578 = vmatmul.mubr.f32.gmra.mrb[0].mxu0 %v501
        %v579 = vpop.f32.mrb[0].mxu0
        %v580 = vadd.f32 %v497, %v579
        %v581 = vpop.f32.mrb[0].mxu0
        %v582 = vadd.f32 %v497, %v581
        %583 = vdwg.mxu0
        %584 = vmatprep.subr.mxu0 0.0
        %585 = vmatpush1.msra.mxu0 %v480
        %586 = vmatprep.subr.mxu0 0.0
        %587 = vmatpush1.msra.mxu0 %v483
        %588 = vmatprep.subr.mxu0 0.0
        %589 = vmatpush1.msra.mxu0 %v486
        %590 = vmatprep.subr.mxu0 0.0
        %591 = vmatpush1.msra.mxu0 %v489
        %592 = vmatprep.subr.mxu0 0.0
        %593 = vmatpush1.msra.mxu0 %v511
        %594 = vmatprep.subr.mxu0 0.0
        %595 = vmatpush1.msra.mxu0 0.0
        %596 = vmatprep.subr.mxu0 0.0
        %597 = vmatpush1.msra.mxu0 0.0
        %598 = vmatprep.subr.mxu0 0.0
        %599 = vmatpush1.msra.mxu0 0.0
        %600 = vmatprep.subr.mxu0 0.0
        %601 = vmatpush1.msra.mxu0 0.0
        %602 = vmatprep.subr.mxu0 0.0
        %603 = vmatpush1.msra.mxu0 0.0
        %604 = vmatprep.subr.mxu0 0.0
        %605 = vmatpush1.msra.mxu0 0.0
        %606 = vmatprep.subr.mxu0 0.0
        %607 = vmatpush1.msra.mxu0 0.0
        %608 = vmatprep.subr.mxu0 0.0
        %609 = vmatpush1.msra.mxu0 0.0
        %610 = vmatprep.subr.mxu0 0.0
        %611 = vmatpush1.msra.mxu0 0.0
        %612 = vmatprep.subr.mxu0 0.0
        %613 = vmatpush1.msra.mxu0 0.0
        %614 = vmatprep.subr.mxu0 0.0
        %615 = vmatpush1.msra.mxu0 0.0
        %616 = vmatprep.subr.mxu0 0.0
        %617 = vmatpush1.msra.mxu0 0.0
        %618 = vmatprep.subr.mxu0 0.0
        %619 = vmatpush1.msra.mxu0 0.0
        %620 = vmatprep.subr.mxu0 0.0
        %621 = vmatpush1.msra.mxu0 0.0
        %622 = vmatprep.subr.mxu0 0.0
        %623 = vmatpush1.msra.mxu0 0.0
        %624 = vmatprep.subr.mxu0 0.0
        %625 = vmatpush1.msra.mxu0 0.0
        %626 = vmatprep.subr.mxu0 0.0
        %627 = vmatpush1.msra.mxu0 0.0
        %628 = vmatprep.subr.mxu0 0.0
        %629 = vmatpush1.msra.mxu0 0.0
        %630 = vmatprep.subr.mxu0 0.0
        %631 = vmatpush1.msra.mxu0 0.0
        %632 = vmatprep.subr.mxu0 0.0
        %633 = vmatpush1.msra.mxu0 0.0
        %634 = vmatprep.subr.mxu0 0.0
        %635 = vmatpush1.msra.mxu0 0.0
        %636 = vmatprep.subr.mxu0 0.0
        %637 = vmatpush1.msra.mxu0 0.0
        %638 = vmatprep.subr.mxu0 0.0
        %639 = vmatpush1.msra.mxu0 0.0
        %640 = vmatprep.subr.mxu0 0.0
        %641 = vmatpush1.msra.mxu0 0.0
        %642 = vmatprep.subr.mxu0 0.0
        %643 = vmatpush1.msra.mxu0 0.0
        %644 = vmatprep.subr.mxu0 0.0
        %645 = vmatpush1.msra.mxu0 0.0
        %646 = vmatprep.subr.mxu0 0.0
        %647 = vmatpush1.msra.mxu0 0.0
        %648 = vmatprep.mubr.f32.mxu0 0.0
        %649 = vmatmul.mubr.f32.gmra.mrb[0].mxu0 %v501
        %v650 = vpop.f32.mrb[0].mxu0
        %v651 = vadd.f32 %v497, %v650
        %v652 = vpop.f32.mrb[0].mxu0
        %653 = vdwg.mxu0
        %654 = vst [vmem:[%s262] sm:$0xff] %v580
        %655 = vst [vmem:[%s262 + $0x8] sm:$0xff] %v582
        %656 = vst [vmem:[%s262 + $0x10] sm:$0xff] %v651
        %s657 = sand.u32 %s130, 1
        %s658 = scalar_lea.sflag [#allocation6], %s657
        %s659 = sand.u32 %s130, 1
        %s660 = smul.addr %s659, 24
        %s661 = scalar_lea.vmem [#allocation9], %s660
        // Predicated region
        $region45: #{tpu_custom_call.1} parent=35 // pred_check
          %p662 = pneg %p140
        $region46: #{tpu_custom_call.1} parent=35 // pred_check_branch
          %664 = sbr.rel (%p662) target = $region48
        $region47: #{tpu_custom_call.1} parent=35 // pred_region
          %s665 = smul.u32 3, %s24
          %s667 = ssub.s32 384, 384
          %668 = vsyncadd %s658, %s667
          %s669 = smul.addr %s665, 128
          %s670 = scalar_lea.hbm %s4, %s669
          %s672 = sshll.u32 %s661, 4
          %s673 = int_to_ptr.vmem [resolvable:$true] %s672
          %675 = dma.vmem_to_hbm [thread:$0]  %s673, 384, %s670, %s658
        $region48: #{tpu_custom_call.1} parent=35 // pred_fallthru
          _
      $region36: #{tpu_custom_call.1} parent=5 // pred_fallthru
        _
      %p676 = scmp.le.s32.totalorder 2, %s19
      // Predicated region
      $region49: #{tpu_custom_call.1} parent=5 // pred_check
        %p677 = pneg %p676
      $region50: #{tpu_custom_call.1} parent=5 // pred_check_branch
        %679 = sbr.rel (%p677) target = $region52
      $region51: #{tpu_custom_call.1} parent=5 // pred_region
        %s680 = ssub.s32 %s19, 2
        // Predicated region
        $region53: #{tpu_custom_call.1} parent=51 // pred_check
          %p681 = pneg %p146
        $region54: #{tpu_custom_call.1} parent=51 // pred_check_branch
          %683 = sbr.rel (%p681) target = $region56
        $region55: #{tpu_custom_call.1} parent=51 // pred_region
          %s684 = sand.u32 %s131, 1
          %s685 = scalar_lea.sflag [#allocation6], %s684
          %s686 = sand.u32 %s131, 1
          %s687 = smul.addr %s686, 24
          %s688 = scalar_lea.vmem [#allocation9], %s687
          %689 = dma.done %s685, 384
        $region56: #{tpu_custom_call.1} parent=51 // pred_fallthru
          _
      $region52: #{tpu_custom_call.1} parent=5 // pred_fallthru
        _
    $region6: #{tpu_custom_call.1} parent=1 // loop_footer
      %s23 = sadd.s32 1, %s19
    $region7: #{tpu_custom_call.1} parent=1 // loop_footer_branch
      %18 = sbr.rel target = $region3
    $region8: #{tpu_custom_call.1} parent=1 // loop_exit
      _
    %690 = vsyncpa [#allocation5], 1
    %s691 = scalar_lea.sflag [#allocation5], 1
    %692 = vsyncpa %s691, 1
    %693 = vsyncpa [#allocation8], 1
    %s694 = scalar_lea.sflag [#allocation8], 1
    %695 = vsyncpa %s694, 1
    %696 = vsyncpa [#allocation6], 1
    %s697 = scalar_lea.sflag [#allocation6], 1
    %698 = vsyncpa %s697, 1

</llo_original>
